<compile_context>
chip_gen: v7x
topology: tpu7x:2x2x1
jax: 0.10.0
libtpu: 0.0.40
codegen_flags: <defaults>
</compile_context>

<pallas_src>
import functools

import jax
import jax.numpy as jnp
from jax.experimental import pallas as pl
from jax.experimental.pallas import tpu as pltpu

H1, H2, H3, H4 = 512, 128, 32, 1


def _mlp_kernel(x_ref, w1_ref, b1_ref, w2_ref, b2_ref,
                w3_ref, b3_ref, w4_ref, b4_ref, o_ref):
    # TODO(synk): training-mode dropout (pltpu.prng_*) not implemented; this
    # kernel matches PyTorch eval() semantics (dropout = identity).

    # In-kernel cast to bf16 (VPU op hidden under MXU work; avoids a wrapper
    # HBM pass over x).
    x = x_ref[...].astype(jnp.bfloat16)

    # fc1 + relu1  (bf16 operands, f32 accumulation on the MXU).  Bias-add,
    # ReLU and the bf16 downcast are one expression so only the bf16 copy of
    # h1 needs to be materialized for fc2.
    h = jnp.dot(x, w1_ref[...], preferred_element_type=jnp.float32)
    h = jnp.maximum(h + b1_ref[...], 0.0).astype(jnp.bfloat16)

    # fc2 + relu2
    h = jnp.dot(h, w2_ref[...], preferred_element_type=jnp.float32)
    h = jnp.maximum(h + b2_ref[...], 0.0).astype(jnp.bfloat16)

    # fc3 + relu3 (kept in f32: consumed by the VPU/XLU fc4 epilogue)
    h = jnp.dot(h, w3_ref[...], preferred_element_type=jnp.float32)
    h = jnp.maximum(h + b3_ref[...], 0.0)                    # (T, H3) f32

    # fc4 + sigmoid.  An N=1 matmul wastes a full MXU pass, so do it on the
    # VPU/XLU: transpose h (T,32)->(32,T), broadcast-multiply with the (32,1)
    # weight column, reduce over sublanes.  Result is lane-dense (1, T).
    ht = h.T                                                 # (H3, T)
    z = jnp.sum(ht * w4_ref[...], axis=0, keepdims=True)     # (1, T)
    y = jax.nn.sigmoid(z + b4_ref[...])                      # b4 is (1, 1)
    o_ref[...] = jnp.reshape(y, o_ref.shape)                 # (1, 1, T) store


def _round_up(a, m):
    return (a + m - 1) // m * m


def _choose_tile(B, batch_tile):
    """Batch tile: <= batch_tile, multiple of 8, and (when the batch allows)
    small enough that the grid has >= 2 steps so both v7x TensorCores work."""
    T = _round_up(min(batch_tile, _round_up(B, 8)), 8)
    if B > 8 and pl.cdiv(B, T) < 2:
        T = _round_up(-(-B // 2), 8)   # ceil(B/2) rounded up to sublane mult
    return T


@functools.partial(jax.jit, static_argnames=("batch_tile",))
def improved_nn_forward(x, params, *, batch_tile=2048):
    """Fused forward pass of ImprovedNN. x: (B, F) float32 -> (B, 1) float32."""
    w1, b1, w2, b2, w3, b3, w4, b4 = params
    B, F = x.shape

    T = _choose_tile(B, batch_tile)
    G = pl.cdiv(B, T)          # ragged last tile handled by Pallas (no jnp.pad)

    # bf16 operands for the MXU layers; tiny fc4 weight + all biases stay f32.
    w1b = w1.astype(jnp.bfloat16)
    w2b = w2.astype(jnp.bfloat16)
    w3b = w3.astype(jnp.bfloat16)
    w4f = w4.astype(jnp.float32)
    b1f, b2f, b3f, b4f = (b.astype(jnp.float32) for b in (b1, b2, b3, b4))

    def bcast(shape):
        # weights / biases are shared (resident) across all batch tiles
        return pl.BlockSpec(shape, lambda i: (0, 0))

    in_specs = [
        pl.BlockSpec((T, F), lambda i: (i, 0)),     # x tile (f32, cast in-kernel)
        bcast((F, H1)),  bcast((1, H1)),            # fc1
        bcast((H1, H2)), bcast((1, H2)),            # fc2
        bcast((H2, H3)), bcast((1, H3)),            # fc3
        bcast((H3, H4)), bcast((1, H4)),            # fc4
    ]
    # Lane-dense output slab: one (1, T) row per batch tile.
    out_specs = pl.BlockSpec((1, 1, T), lambda i: (i, 0, 0))
    out_shape = jax.ShapeDtypeStruct((G, 1, T), jnp.float32)

    Bp = G * T
    flops = 2 * Bp * (F * H1 + H1 * H2 + H2 * H3 + H3 * H4)
    bytes_accessed = (
        B * F * 4                                     # x (f32)
        + (w1b.size + w2b.size + w3b.size) * 2        # bf16 weights
        + (w4f.size + b1f.size + b2f.size + b3f.size + b4f.size) * 4
        + Bp * 4)                                     # output slab
    cost = pl.CostEstimate(flops=flops, transcendentals=Bp,
                           bytes_accessed=bytes_accessed)

    out = pl.pallas_call(
        _mlp_kernel,
        out_shape=out_shape,
        grid=(G,),
        in_specs=in_specs,
        out_specs=out_specs,
        compiler_params=pltpu.CompilerParams(
            dimension_semantics=("parallel",),
            # ~9-10 MB live at T=2048; 32 MiB keeps double-buffer headroom and
            # is safe on v7x's 64 MiB VMEM as well as v5e/v6e.
            vmem_limit_bytes=32 * 1024 * 1024),
        cost_estimate=cost,
    )(x.astype(jnp.float32), w1b, b1f, w2b, b2f, w3b, b3f, w4f, b4f)

    # Garbage rows from the ragged last tile are sliced off here; nothing
    # scans the full (G, 1, T) slab before this slice.
    return out.reshape(Bp, 1)[:B]


def init_params(key, input_size):
    """Deterministic init mimicking torch.nn.Linear default:
    U(-1/sqrt(fan_in), 1/sqrt(fan_in)).  Weights stored as (in, out)."""
    dims = [(input_size, H1), (H1, H2), (H2, H3), (H3, H4)]
    params = []
    for (fan_in, fan_out) in dims:
        key, kw, kb = jax.random.split(key, 3)
        bound = 1.0 / jnp.sqrt(float(fan_in))
        w = jax.random.uniform(kw, (fan_in, fan_out), jnp.float32,
                               minval=-bound, maxval=bound)
        b = jax.random.uniform(kb, (1, fan_out), jnp.float32,
                               minval=-bound, maxval=bound)
        params.extend([w, b])
    return tuple(params)


def reference_forward(x, params):
    """Pure-JAX f32 reference of the same forward pass (validation only)."""
    w1, b1, w2, b2, w3, b3, w4, b4 = params
    h = jnp.maximum(x @ w1 + b1, 0.0)
    h = jnp.maximum(h @ w2 + b2, 0.0)
    h = jnp.maximum(h @ w3 + b3, 0.0)
    return jax.nn.sigmoid(h @ w4 + b4)


if __name__ == "__main__":
    key = jax.random.PRNGKey(0)
    input_size = 32  # small synthetic feature count (X_train.shape[1])

    key, kx, kp = jax.random.split(key, 3)
    params = init_params(kp, input_size)

    # Small smoke test: tile-selection splits B=16 into two tiles of 8 (G=2).
    x = jax.random.normal(kx, (16, input_size), jnp.float32)
    out = jax.block_until_ready(improved_nn_forward(x, params))
    ref = reference_forward(x, params)
    assert out.shape == (16, 1)
    # bf16 operands -> loosened tolerance vs. the f32 reference.
    assert jnp.allclose(out, ref, atol=5e-2, rtol=5e-2)

    # Exercise the ragged last tile + a multi-step grid (100 -> 4 tiles of 32,
    # last tile partially out-of-bounds, discarded by the [:B] slice).
    key, kx2 = jax.random.split(key)
    x2 = jax.random.normal(kx2, (100, input_size), jnp.float32)
    out2 = jax.block_until_ready(improved_nn_forward(x2, params, batch_tile=32))
    ref2 = reference_forward(x2, params)
    assert out2.shape == (100, 1)
    assert jnp.allclose(out2, ref2, atol=5e-2, rtol=5e-2)

    # Default (large) tile path on a modest batch: G is forced to 2.
    out3 = jax.block_until_ready(improved_nn_forward(x2, params))
    assert out3.shape == (100, 1)
    assert jnp.allclose(out3, ref2, atol=5e-2, rtol=5e-2)

    print("KERNEL_OK")
</pallas_src>

<mosaic_0001>
module attributes {stable_mosaic.version = 11 : i64} {
  func.func @_mlp_kernel(%arg0: i32, %arg1: memref<8x32xf32, #tpu.memory_space<vmem>>, %arg2: memref<32x512xbf16, #tpu.memory_space<vmem>>, %arg3: memref<1x512xf32, #tpu.memory_space<vmem>>, %arg4: memref<512x128xbf16, #tpu.memory_space<vmem>>, %arg5: memref<1x128xf32, #tpu.memory_space<vmem>>, %arg6: memref<128x32xbf16, #tpu.memory_space<vmem>>, %arg7: memref<1x32xf32, #tpu.memory_space<vmem>>, %arg8: memref<32x1xf32, #tpu.memory_space<vmem>>, %arg9: memref<1x1xf32, #tpu.memory_space<vmem>>, %arg10: memref<1x1x8xf32, #tpu.memory_space<vmem>>) attributes {dimension_semantics = [#tpu.dimension_semantics<parallel>], iteration_bounds = array<i64: 2>, scalar_prefetch = 0 : i64, scratch_operands = 0 : i64, tpu.core_type = #tpu.core_type<tc>, window_params = [{transform_indices = @transform_0, window_bounds = array<i64: 8, 32>}, {pipeline_mode = #tpu.pipeline_mode<synchronous>, transform_indices = @transform_1, window_bounds = array<i64: 32, 512>}, {pipeline_mode = #tpu.pipeline_mode<synchronous>, transform_indices = @transform_2, window_bounds = array<i64: 1, 512>}, {pipeline_mode = #tpu.pipeline_mode<synchronous>, transform_indices = @transform_3, window_bounds = array<i64: 512, 128>}, {pipeline_mode = #tpu.pipeline_mode<synchronous>, transform_indices = @transform_4, window_bounds = array<i64: 1, 128>}, {pipeline_mode = #tpu.pipeline_mode<synchronous>, transform_indices = @transform_5, window_bounds = array<i64: 128, 32>}, {pipeline_mode = #tpu.pipeline_mode<synchronous>, transform_indices = @transform_6, window_bounds = array<i64: 1, 32>}, {pipeline_mode = #tpu.pipeline_mode<synchronous>, transform_indices = @transform_7, window_bounds = array<i64: 32, 1>}, {pipeline_mode = #tpu.pipeline_mode<synchronous>, transform_indices = @transform_8, window_bounds = array<i64: 1, 1>}, {transform_indices = @transform_9, window_bounds = array<i64: 1, 1, 8>}]} {
    %c0 = arith.constant 0 : index
    %c0_0 = arith.constant 0 : index
    %0 = vector.load %arg1[%c0, %c0_0] : memref<8x32xf32, #tpu.memory_space<vmem>>, vector<8x32xf32>
    %1 = arith.truncf %0 : vector<8x32xf32> to vector<8x32xbf16>
    %c0_1 = arith.constant 0 : index
    %c0_2 = arith.constant 0 : index
    %2 = vector.load %arg2[%c0_1, %c0_2] : memref<32x512xbf16, #tpu.memory_space<vmem>>, vector<32x512xbf16>
    %cst = arith.constant dense<0.000000e+00> : vector<8x512xf32>
    %3 = tpu.matmul %1, %2, %cst {dimension_numbers = #tpu.dot_dimension_numbers<[1], [0], [0], [1], [0, 0, 1, 1], [], []>} : vector<8x32xbf16>, vector<32x512xbf16>, vector<8x512xf32> -> vector<8x512xf32>
    %c0_3 = arith.constant 0 : index
    %c0_4 = arith.constant 0 : index
    %4 = vector.load %arg3[%c0_3, %c0_4] : memref<1x512xf32, #tpu.memory_space<vmem>>, vector<1x512xf32>
    %5 = vector.broadcast %4 : vector<1x512xf32> to vector<8x512xf32>
    %6 = arith.addf %3, %5 : vector<8x512xf32>
    %cst_5 = arith.constant 0.000000e+00 : f32
    %7 = vector.broadcast %cst_5 : f32 to vector<8x512xf32>
    %8 = arith.maximumf %6, %7 : vector<8x512xf32>
    %9 = arith.truncf %8 : vector<8x512xf32> to vector<8x512xbf16>
    %c0_6 = arith.constant 0 : index
    %c0_7 = arith.constant 0 : index
    %10 = vector.load %arg4[%c0_6, %c0_7] : memref<512x128xbf16, #tpu.memory_space<vmem>>, vector<512x128xbf16>
    %cst_8 = arith.constant dense<0.000000e+00> : vector<8x128xf32>
    %11 = tpu.matmul %9, %10, %cst_8 {dimension_numbers = #tpu.dot_dimension_numbers<[1], [0], [0], [1], [0, 0, 1, 1], [], []>} : vector<8x512xbf16>, vector<512x128xbf16>, vector<8x128xf32> -> vector<8x128xf32>
    %c0_9 = arith.constant 0 : index
    %c0_10 = arith.constant 0 : index
    %12 = vector.load %arg5[%c0_9, %c0_10] : memref<1x128xf32, #tpu.memory_space<vmem>>, vector<1x128xf32>
    %13 = vector.broadcast %12 : vector<1x128xf32> to vector<8x128xf32>
    %14 = arith.addf %11, %13 : vector<8x128xf32>
    %cst_11 = arith.constant 0.000000e+00 : f32
    %15 = vector.broadcast %cst_11 : f32 to vector<8x128xf32>
    %16 = arith.maximumf %14, %15 : vector<8x128xf32>
    %17 = arith.truncf %16 : vector<8x128xf32> to vector<8x128xbf16>
    %c0_12 = arith.constant 0 : index
    %c0_13 = arith.constant 0 : index
    %18 = vector.load %arg6[%c0_12, %c0_13] : memref<128x32xbf16, #tpu.memory_space<vmem>>, vector<128x32xbf16>
    %cst_14 = arith.constant dense<0.000000e+00> : vector<8x32xf32>
    %19 = tpu.matmul %17, %18, %cst_14 {dimension_numbers = #tpu.dot_dimension_numbers<[1], [0], [0], [1], [0, 0, 1, 1], [], []>} : vector<8x128xbf16>, vector<128x32xbf16>, vector<8x32xf32> -> vector<8x32xf32>
    %c0_15 = arith.constant 0 : index
    %c0_16 = arith.constant 0 : index
    %20 = vector.load %arg7[%c0_15, %c0_16] : memref<1x32xf32, #tpu.memory_space<vmem>>, vector<1x32xf32>
    %21 = vector.broadcast %20 : vector<1x32xf32> to vector<8x32xf32>
    %22 = arith.addf %19, %21 : vector<8x32xf32>
    %cst_17 = arith.constant 0.000000e+00 : f32
    %23 = vector.broadcast %cst_17 : f32 to vector<8x32xf32>
    %24 = arith.maximumf %22, %23 : vector<8x32xf32>
    %25 = tpu.transpose %24, [1, 0] : vector<8x32xf32> -> vector<32x8xf32>
    %c0_18 = arith.constant 0 : index
    %c0_19 = arith.constant 0 : index
    %26 = vector.load %arg8[%c0_18, %c0_19] : memref<32x1xf32, #tpu.memory_space<vmem>>, vector<32x1xf32>
    %27 = vector.broadcast %26 : vector<32x1xf32> to vector<32x8xf32>
    %28 = arith.mulf %25, %27 : vector<32x8xf32>
    %cst_20 = arith.constant dense<0.000000e+00> : vector<8xf32>
    %29 = vector.multi_reduction <add>, %28, %cst_20 [0] : vector<32x8xf32> to vector<8xf32>
    %30 = vector.shape_cast %29 : vector<8xf32> to vector<1x8xf32>
    %c0_21 = arith.constant 0 : index
    %c0_22 = arith.constant 0 : index
    %31 = vector.load %arg9[%c0_21, %c0_22] : memref<1x1xf32, #tpu.memory_space<vmem>>, vector<1x1xf32>
    %32 = vector.broadcast %31 : vector<1x1xf32> to vector<1x8xf32>
    %33 = arith.addf %30, %32 : vector<1x8xf32>
    %34 = arith.negf %33 : vector<1x8xf32>
    %35 = math.exp %34 : vector<1x8xf32>
    %cst_23 = arith.constant 1.000000e+00 : f32
    %36 = vector.broadcast %cst_23 : f32 to vector<1x8xf32>
    %37 = arith.addf %36, %35 : vector<1x8xf32>
    %38 = arith.divf %36, %37 : vector<1x8xf32>
    %39 = vector.shape_cast %38 : vector<1x8xf32> to vector<1x1x8xf32>
    %c0_24 = arith.constant 0 : index
    %c0_25 = arith.constant 0 : index
    %c0_26 = arith.constant 0 : index
    %40 = vector.load %arg10[%c0_24, %c0_25, %c0_26] : memref<1x1x8xf32, #tpu.memory_space<vmem>>, vector<1x1x8xf32>
    tpu.vector_store %arg10[%c0_24, %c0_25, %c0_26], %39 {strides = array<i32>} : memref<1x1x8xf32, #tpu.memory_space<vmem>>, vector<1x1x8xf32>,
    return
  }
  func.func @transform_0(%arg0: i32) -> (i32, i32) {
    %c0_i32 = arith.constant 0 : i32
    %c0_i32_0 = arith.constant 0 : i32
    return %arg0, %c0_i32 : i32, i32
  }
  func.func @transform_1(%arg0: i32) -> (i32, i32) {
    %c0_i32 = arith.constant 0 : i32
    %c0_i32_0 = arith.constant 0 : i32
    %c0_i32_1 = arith.constant 0 : i32
    return %c0_i32, %c0_i32_0 : i32, i32
  }
  func.func @transform_2(%arg0: i32) -> (i32, i32) {
    %c0_i32 = arith.constant 0 : i32
    %c0_i32_0 = arith.constant 0 : i32
    %c0_i32_1 = arith.constant 0 : i32
    return %c0_i32, %c0_i32_0 : i32, i32
  }
  func.func @transform_3(%arg0: i32) -> (i32, i32) {
    %c0_i32 = arith.constant 0 : i32
    %c0_i32_0 = arith.constant 0 : i32
    %c0_i32_1 = arith.constant 0 : i32
    return %c0_i32, %c0_i32_0 : i32, i32
  }
  func.func @transform_4(%arg0: i32) -> (i32, i32) {
    %c0_i32 = arith.constant 0 : i32
    %c0_i32_0 = arith.constant 0 : i32
    %c0_i32_1 = arith.constant 0 : i32
    return %c0_i32, %c0_i32_0 : i32, i32
  }
  func.func @transform_5(%arg0: i32) -> (i32, i32) {
    %c0_i32 = arith.constant 0 : i32
    %c0_i32_0 = arith.constant 0 : i32
    %c0_i32_1 = arith.constant 0 : i32
    return %c0_i32, %c0_i32_0 : i32, i32
  }
  func.func @transform_6(%arg0: i32) -> (i32, i32) {
    %c0_i32 = arith.constant 0 : i32
    %c0_i32_0 = arith.constant 0 : i32
    %c0_i32_1 = arith.constant 0 : i32
    return %c0_i32, %c0_i32_0 : i32, i32
  }
  func.func @transform_7(%arg0: i32) -> (i32, i32) {
    %c0_i32 = arith.constant 0 : i32
    %c0_i32_0 = arith.constant 0 : i32
    %c0_i32_1 = arith.constant 0 : i32
    return %c0_i32, %c0_i32_0 : i32, i32
  }
  func.func @transform_8(%arg0: i32) -> (i32, i32) {
    %c0_i32 = arith.constant 0 : i32
    %c0_i32_0 = arith.constant 0 : i32
    %c0_i32_1 = arith.constant 0 : i32
    return %c0_i32, %c0_i32_0 : i32, i32
  }
  func.func @transform_9(%arg0: i32) -> (i32, i32, i32) {
    %c0_i32 = arith.constant 0 : i32
    %c0_i32_0 = arith.constant 0 : i32
    %c0_i32_1 = arith.constant 0 : i32
    return %arg0, %c0_i32, %c0_i32_0 : i32, i32, i32
  }
}

</mosaic_0001>

<llo_original>
// kernel: improved_nn_forward.1
$region0: #{improved_nn_forward.1}
  #allocation0 [shape = 'u32[]', space=smem, size = 0x4, offset = 0x4, fixed_abs, tag = 'smem constant byte address 0x4 - core index']
  #allocation1 [shape = 'u32[144,128]{1,0:T(1,128)}', space=vmem, size = 0x12000, scoped, tag = 'internal scratch']
  #allocation2 [shape = 'f32[1,1]{1,0:T(1,128)S(1)}', space=vmem, size = 0x200, scoped, tag = 'scoped memory for improved_nn_forward.1']
  %s0 = inlined_call_operand.vmem [shape: f32[16,32], index: 0, kind: input, shape index: {}]
  %s1 = inlined_call_operand.vmem [shape: bf16[32,512], index: 1, kind: input, shape index: {}]
  %s2 = inlined_call_operand.vmem [shape: f32[1,512], index: 2, kind: input, shape index: {}]
  %s3 = inlined_call_operand.vmem [shape: bf16[512,128], index: 3, kind: input, shape index: {}]
  %s4 = inlined_call_operand.vmem [shape: f32[1,128], index: 4, kind: input, shape index: {}]
  %s5 = inlined_call_operand.vmem [shape: bf16[128,32], index: 5, kind: input, shape index: {}]
  %s6 = inlined_call_operand.vmem [shape: f32[1,32], index: 6, kind: input, shape index: {}]
  %s7 = inlined_call_operand.vmem [shape: f32[32,1], index: 7, kind: input, shape index: {}]
  %s8 = inlined_call_operand.<no memory space> [shape: f32[1,1], index: 8, kind: input, shape index: {}]
  %s9 = inlined_call_operand.vmem [shape: f32[2,1,8], index: 9, kind: output, shape index: {}]
  %s10 = sld [smem:[#allocation0]]
  $region69: #{improved_nn_forward.1} parent=0
    _
  %s12 = ssub.s32 1, %s10
  %s13 = scalar_select 0, %s12, %s10
  %v14 = vstv %s8
  %15 = vst [vmem:[#allocation2] sm:$0x1] %v14
  loop: start=0, step=1, limit=4
  $region2: #{improved_nn_forward.1} parent=0 // loop_pre_header
    _
  $region3: #{improved_nn_forward.1} parent=0 // loop_header
    %s17 = sphi 0, %s21
    %p18 = scmp.ge.s32.totalorder %s17, 4
    %s27 = sphi 0, %s29
    %s30 = sphi 0, %s27
    %s31 = sphi 0, %s30
    %s47 = sphi 0, %s31
    %s51 = sphi 0, %s51
    %s53 = sphi 0, %s51
    %s54 = sphi 0, %s53
    %s68 = sphi 0, %s54
    %s72 = sphi 0, %s72
    %s74 = sphi 0, %s72
    %s75 = sphi 0, %s74
    %s89 = sphi 0, %s75
    %s93 = sphi 0, %s93
    %s95 = sphi 0, %s93
    %s96 = sphi 0, %s95
    %s110 = sphi 0, %s96
    %s114 = sphi 0, %s114
    %s116 = sphi 0, %s114
    %s117 = sphi 0, %s116
    %s131 = sphi 0, %s117
    %s135 = sphi 0, %s135
    %s137 = sphi 0, %s135
    %s138 = sphi 0, %s137
    %s152 = sphi 0, %s138
    %s156 = sphi 0, %s156
    %s158 = sphi 0, %s156
    %s159 = sphi 0, %s158
    %s173 = sphi 0, %s159
    %s177 = sphi 0, %s177
    %s179 = sphi 0, %s177
    %s180 = sphi 0, %s179
    %s194 = sphi 0, %s180
    %s198 = sphi 0, %s198
    %s200 = sphi 0, %s198
    %s201 = sphi 0, %s200
    %s215 = sphi 0, %s201
    %s221 = sphi 0, %s223
    %s224 = sphi 0, %s221
    %s225 = sphi 0, %s224
    %s241 = sphi 0, %s225
  $region4: #{improved_nn_forward.1} parent=0 // loop_header_branch
    %20 = sbr.rel (%p18) target = $region8
  $region5: #{improved_nn_forward.1} parent=0 // loop_body
    %s22 = ssub.s32 %s17, 1
    %s23 = ssub.s32 %s17, 2
    %s24 = sadd.s32 %s17, 1
    %s25 = ssub.s32 %s17, %s24
    %p26 = scmp.eq.s32.totalorder %s25, 0
    %s28 = sadd.s32 %s27, 1
    %s29 = scalar_select %p26, %s27, %s28
    %p32 = pneg %p26
    %p33 = scmp.eq.s32.totalorder %s17, 1
    %p34 = por %p32, %p33
    %p35 = scmp.ne.s32.totalorder %s27, %s30
    %p36 = scmp.eq.s32.totalorder %s17, 0
    %p37 = por %p35, %p36
    %p38 = scmp.ne.s32.totalorder %s27, %s30
    %p39 = scmp.eq.s32.totalorder %s22, 1
    %p40 = por %p38, %p39
    %p41 = scmp.ne.s32.totalorder %s30, %s31
    %p42 = scmp.eq.s32.totalorder %s22, 0
    %p43 = por %p41, %p42
    %p44 = scmp.ne.s32.totalorder %s30, %s31
    %p45 = scmp.eq.s32.totalorder %s23, 1
    %p46 = por %p44, %p45
    %p48 = scmp.ne.s32.totalorder %s31, %s47
    %p49 = scmp.eq.s32.totalorder %s23, 0
    %p50 = por %p48, %p49
    %s52 = sadd.s32 %s51, 1
    %p55 = scmp.eq.s32.totalorder %s17, 1
    %p56 = scmp.ne.s32.totalorder %s51, %s53
    %p57 = scmp.eq.s32.totalorder %s17, 0
    %p58 = por %p56, %p57
    %p59 = scmp.ne.s32.totalorder %s51, %s53
    %p60 = scmp.eq.s32.totalorder %s22, 1
    %p61 = por %p59, %p60
    %p62 = scmp.ne.s32.totalorder %s53, %s54
    %p63 = scmp.eq.s32.totalorder %s22, 0
    %p64 = por %p62, %p63
    %p65 = scmp.ne.s32.totalorder %s53, %s54
    %p66 = scmp.eq.s32.totalorder %s23, 1
    %p67 = por %p65, %p66
    %p69 = scmp.ne.s32.totalorder %s54, %s68
    %p70 = scmp.eq.s32.totalorder %s23, 0
    %p71 = por %p69, %p70
    %s73 = sadd.s32 %s72, 1
    %p76 = scmp.eq.s32.totalorder %s17, 1
    %p77 = scmp.ne.s32.totalorder %s72, %s74
    %p78 = scmp.eq.s32.totalorder %s17, 0
    %p79 = por %p77, %p78
    %p80 = scmp.ne.s32.totalorder %s72, %s74
    %p81 = scmp.eq.s32.totalorder %s22, 1
    %p82 = por %p80, %p81
    %p83 = scmp.ne.s32.totalorder %s74, %s75
    %p84 = scmp.eq.s32.totalorder %s22, 0
    %p85 = por %p83, %p84
    %p86 = scmp.ne.s32.totalorder %s74, %s75
    %p87 = scmp.eq.s32.totalorder %s23, 1
    %p88 = por %p86, %p87
    %p90 = scmp.ne.s32.totalorder %s75, %s89
    %p91 = scmp.eq.s32.totalorder %s23, 0
    %p92 = por %p90, %p91
    %s94 = sadd.s32 %s93, 1
    %p97 = scmp.eq.s32.totalorder %s17, 1
    %p98 = scmp.ne.s32.totalorder %s93, %s95
    %p99 = scmp.eq.s32.totalorder %s17, 0
    %p100 = por %p98, %p99
    %p101 = scmp.ne.s32.totalorder %s93, %s95
    %p102 = scmp.eq.s32.totalorder %s22, 1
    %p103 = por %p101, %p102
    %p104 = scmp.ne.s32.totalorder %s95, %s96
    %p105 = scmp.eq.s32.totalorder %s22, 0
    %p106 = por %p104, %p105
    %p107 = scmp.ne.s32.totalorder %s95, %s96
    %p108 = scmp.eq.s32.totalorder %s23, 1
    %p109 = por %p107, %p108
    %p111 = scmp.ne.s32.totalorder %s96, %s110
    %p112 = scmp.eq.s32.totalorder %s23, 0
    %p113 = por %p111, %p112
    %s115 = sadd.s32 %s114, 1
    %p118 = scmp.eq.s32.totalorder %s17, 1
    %p119 = scmp.ne.s32.totalorder %s114, %s116
    %p120 = scmp.eq.s32.totalorder %s17, 0
    %p121 = por %p119, %p120
    %p122 = scmp.ne.s32.totalorder %s114, %s116
    %p123 = scmp.eq.s32.totalorder %s22, 1
    %p124 = por %p122, %p123
    %p125 = scmp.ne.s32.totalorder %s116, %s117
    %p126 = scmp.eq.s32.totalorder %s22, 0
    %p127 = por %p125, %p126
    %p128 = scmp.ne.s32.totalorder %s116, %s117
    %p129 = scmp.eq.s32.totalorder %s23, 1
    %p130 = por %p128, %p129
    %p132 = scmp.ne.s32.totalorder %s117, %s131
    %p133 = scmp.eq.s32.totalorder %s23, 0
    %p134 = por %p132, %p133
    %s136 = sadd.s32 %s135, 1
    %p139 = scmp.eq.s32.totalorder %s17, 1
    %p140 = scmp.ne.s32.totalorder %s135, %s137
    %p141 = scmp.eq.s32.totalorder %s17, 0
    %p142 = por %p140, %p141
    %p143 = scmp.ne.s32.totalorder %s135, %s137
    %p144 = scmp.eq.s32.totalorder %s22, 1
    %p145 = por %p143, %p144
    %p146 = scmp.ne.s32.totalorder %s137, %s138
    %p147 = scmp.eq.s32.totalorder %s22, 0
    %p148 = por %p146, %p147
    %p149 = scmp.ne.s32.totalorder %s137, %s138
    %p150 = scmp.eq.s32.totalorder %s23, 1
    %p151 = por %p149, %p150
    %p153 = scmp.ne.s32.totalorder %s138, %s152
    %p154 = scmp.eq.s32.totalorder %s23, 0
    %p155 = por %p153, %p154
    %s157 = sadd.s32 %s156, 1
    %p160 = scmp.eq.s32.totalorder %s17, 1
    %p161 = scmp.ne.s32.totalorder %s156, %s158
    %p162 = scmp.eq.s32.totalorder %s17, 0
    %p163 = por %p161, %p162
    %p164 = scmp.ne.s32.totalorder %s156, %s158
    %p165 = scmp.eq.s32.totalorder %s22, 1
    %p166 = por %p164, %p165
    %p167 = scmp.ne.s32.totalorder %s158, %s159
    %p168 = scmp.eq.s32.totalorder %s22, 0
    %p169 = por %p167, %p168
    %p170 = scmp.ne.s32.totalorder %s158, %s159
    %p171 = scmp.eq.s32.totalorder %s23, 1
    %p172 = por %p170, %p171
    %p174 = scmp.ne.s32.totalorder %s159, %s173
    %p175 = scmp.eq.s32.totalorder %s23, 0
    %p176 = por %p174, %p175
    %s178 = sadd.s32 %s177, 1
    %p181 = scmp.eq.s32.totalorder %s17, 1
    %p182 = scmp.ne.s32.totalorder %s177, %s179
    %p183 = scmp.eq.s32.totalorder %s17, 0
    %p184 = por %p182, %p183
    %p185 = scmp.ne.s32.totalorder %s177, %s179
    %p186 = scmp.eq.s32.totalorder %s22, 1
    %p187 = por %p185, %p186
    %p188 = scmp.ne.s32.totalorder %s179, %s180
    %p189 = scmp.eq.s32.totalorder %s22, 0
    %p190 = por %p188, %p189
    %p191 = scmp.ne.s32.totalorder %s179, %s180
    %p192 = scmp.eq.s32.totalorder %s23, 1
    %p193 = por %p191, %p192
    %p195 = scmp.ne.s32.totalorder %s180, %s194
    %p196 = scmp.eq.s32.totalorder %s23, 0
    %p197 = por %p195, %p196
    %s199 = sadd.s32 %s198, 1
    %p202 = scmp.eq.s32.totalorder %s17, 1
    %p203 = scmp.ne.s32.totalorder %s198, %s200
    %p204 = scmp.eq.s32.totalorder %s17, 0
    %p205 = por %p203, %p204
    %p206 = scmp.ne.s32.totalorder %s198, %s200
    %p207 = scmp.eq.s32.totalorder %s22, 1
    %p208 = por %p206, %p207
    %p209 = scmp.ne.s32.totalorder %s200, %s201
    %p210 = scmp.eq.s32.totalorder %s22, 0
    %p211 = por %p209, %p210
    %p212 = scmp.ne.s32.totalorder %s200, %s201
    %p213 = scmp.eq.s32.totalorder %s23, 1
    %p214 = por %p212, %p213
    %p216 = scmp.ne.s32.totalorder %s201, %s215
    %p217 = scmp.eq.s32.totalorder %s23, 0
    %p218 = por %p216, %p217
    %s219 = ssub.s32 %s17, %s24
    %p220 = scmp.eq.s32.totalorder %s219, 0
    %s222 = sadd.s32 %s221, 1
    %s223 = scalar_select %p220, %s221, %s222
    %p226 = pneg %p220
    %p227 = scmp.eq.s32.totalorder %s17, 1
    %p228 = por %p226, %p227
    %p229 = scmp.ne.s32.totalorder %s221, %s224
    %p230 = scmp.eq.s32.totalorder %s17, 0
    %p231 = por %p229, %p230
    %p232 = scmp.ne.s32.totalorder %s221, %s224
    %p233 = scmp.eq.s32.totalorder %s22, 1
    %p234 = por %p232, %p233
    %p235 = scmp.ne.s32.totalorder %s224, %s225
    %p236 = scmp.eq.s32.totalorder %s22, 0
    %p237 = por %p235, %p236
    %p238 = scmp.ne.s32.totalorder %s224, %s225
    %p239 = scmp.eq.s32.totalorder %s23, 1
    %p240 = por %p238, %p239
    %p242 = scmp.ne.s32.totalorder %s225, %s241
    %p243 = scmp.eq.s32.totalorder %s23, 0
    %p244 = por %p242, %p243
    %p245 = scmp.le.s32.totalorder 1, %s17
    %p246 = scmp.lt.s32.totalorder %s17, 3
    %p247 = pnand %p245, %p246
    %p248 = pneg %p247
    // Predicated region
    $region9: #{improved_nn_forward.1} parent=5 // pred_check
      _
    $region10: #{improved_nn_forward.1} parent=5 // pred_check_branch
      %250 = sbr.rel (%p247) target = $region12
    $region11: #{improved_nn_forward.1} parent=5 // pred_region
      %s251 = ssub.s32 %s17, 1
      // Predicated region
      $region13: #{improved_nn_forward.1} parent=11 // pred_check
        %p252 = pneg %p64
      $region14: #{improved_nn_forward.1} parent=11 // pred_check_branch
        %254 = sbr.rel (%p252) target = $region16
      $region15: #{improved_nn_forward.1} parent=11 // pred_region
        _
      $region16: #{improved_nn_forward.1} parent=11 // pred_fallthru
        _
      // Predicated region
      $region17: #{improved_nn_forward.1} parent=11 // pred_check
        %p255 = pneg %p85
      $region18: #{improved_nn_forward.1} parent=11 // pred_check_branch
        %257 = sbr.rel (%p255) target = $region20
      $region19: #{improved_nn_forward.1} parent=11 // pred_region
        _
      $region20: #{improved_nn_forward.1} parent=11 // pred_fallthru
        _
      // Predicated region
      $region21: #{improved_nn_forward.1} parent=11 // pred_check
        %p258 = pneg %p106
      $region22: #{improved_nn_forward.1} parent=11 // pred_check_branch
        %260 = sbr.rel (%p258) target = $region24
      $region23: #{improved_nn_forward.1} parent=11 // pred_region
        _
      $region24: #{improved_nn_forward.1} parent=11 // pred_fallthru
        _
      // Predicated region
      $region25: #{improved_nn_forward.1} parent=11 // pred_check
        %p261 = pneg %p127
      $region26: #{improved_nn_forward.1} parent=11 // pred_check_branch
        %263 = sbr.rel (%p261) target = $region28
      $region27: #{improved_nn_forward.1} parent=11 // pred_region
        _
      $region28: #{improved_nn_forward.1} parent=11 // pred_fallthru
        _
      // Predicated region
      $region29: #{improved_nn_forward.1} parent=11 // pred_check
        %p264 = pneg %p148
      $region30: #{improved_nn_forward.1} parent=11 // pred_check_branch
        %266 = sbr.rel (%p264) target = $region32
      $region31: #{improved_nn_forward.1} parent=11 // pred_region
        _
      $region32: #{improved_nn_forward.1} parent=11 // pred_fallthru
        _
      // Predicated region
      $region33: #{improved_nn_forward.1} parent=11 // pred_check
        %p267 = pneg %p169
      $region34: #{improved_nn_forward.1} parent=11 // pred_check_branch
        %269 = sbr.rel (%p267) target = $region36
      $region35: #{improved_nn_forward.1} parent=11 // pred_region
        _
      $region36: #{improved_nn_forward.1} parent=11 // pred_fallthru
        _
      // Predicated region
      $region37: #{improved_nn_forward.1} parent=11 // pred_check
        %p270 = pneg %p190
      $region38: #{improved_nn_forward.1} parent=11 // pred_check_branch
        %272 = sbr.rel (%p270) target = $region40
      $region39: #{improved_nn_forward.1} parent=11 // pred_region
        _
      $region40: #{improved_nn_forward.1} parent=11 // pred_fallthru
        _
      // Predicated region
      $region41: #{improved_nn_forward.1} parent=11 // pred_check
        %p273 = pneg %p211
      $region42: #{improved_nn_forward.1} parent=11 // pred_check_branch
        %275 = sbr.rel (%p273) target = $region44
      $region43: #{improved_nn_forward.1} parent=11 // pred_region
        _
      $region44: #{improved_nn_forward.1} parent=11 // pred_fallthru
        _
    $region12: #{improved_nn_forward.1} parent=5 // pred_fallthru
      _
    %p276 = scmp.lt.s32.totalorder %s17, 2
    // Predicated region
    $region45: #{improved_nn_forward.1} parent=5 // pred_check
      %p277 = pneg %p276
    $region46: #{improved_nn_forward.1} parent=5 // pred_check_branch
      %279 = sbr.rel (%p277) target = $region48
    $region47: #{improved_nn_forward.1} parent=5 // pred_region
      // Predicated region
      $region49: #{improved_nn_forward.1} parent=47 // pred_check
        %p280 = pneg %p37
      $region50: #{improved_nn_forward.1} parent=47 // pred_check_branch
        %282 = sbr.rel (%p280) target = $region52
      $region51: #{improved_nn_forward.1} parent=47 // pred_region
        %p283 = scmp.lt.s32.totalorder %s17, 1
        %s284 = scalar_select %p283, %s17, 1
        %s285 = smul.addr %s284, 8
        %s286 = scalar_lea.vmem %s0, %s285
      $region52: #{improved_nn_forward.1} parent=47 // pred_fallthru
        _
    $region48: #{improved_nn_forward.1} parent=5 // pred_fallthru
      _
    %p287 = scmp.le.s32.totalorder 1, %s17
    %p288 = scmp.lt.s32.totalorder %s17, 3
    %p289 = pnand %p287, %p288
    %p290 = pneg %p289
    // Predicated region
    $region53: #{improved_nn_forward.1} parent=5 // pred_check
      _
    $region54: #{improved_nn_forward.1} parent=5 // pred_check_branch
      %292 = sbr.rel (%p289) target = $region56
    $region55: #{improved_nn_forward.1} parent=5 // pred_region
      %s293 = ssub.s32 %s17, 1
      %p294 = scmp.lt.s32.totalorder %s22, 1
      %s295 = scalar_select %p294, %s22, 1
      %s296 = smul.addr %s295, 8
      %s297 = scalar_lea.vmem %s0, %s296
      %p298 = pneg %p43
      %p299 = pneg %p40
      %p300 = pneg %p64
      %p301 = pneg %p61
      %p302 = pneg %p85
      %p303 = pneg %p82
      %p304 = pneg %p106
      %p305 = pneg %p103
      %p306 = pneg %p127
      %p307 = pneg %p124
      %p308 = pneg %p148
      %p309 = pneg %p145
      %p310 = pneg %p169
      %p311 = pneg %p166
      %p312 = pneg %p190
      %p313 = pneg %p187
      %p314 = pneg %p211
      %p315 = pneg %p208
      %p316 = pneg %p237
      %p317 = pneg %p234
      %p318 = scmp.lt.s32.totalorder %s22, 1
      %s319 = scalar_select %p318, %s22, 1
      %s320 = scalar_lea.vmem %s9, %s319
      %p321 = scmp.lt.s32.totalorder %s22, 1
      %s322 = scalar_select %p321, %s22, 1
      %s323 = smul.addr %s322, 8
      %s324 = scalar_lea.vmem %s0, %s323
      %p325 = scmp.lt.s32.totalorder %s22, 1
      %s326 = scalar_select %p325, %s22, 1
      %s327 = scalar_lea.vmem %s9, %s326
      %v329 = vld [vmem:[%s324] sm:$0xff]
      %v330 = vpack.c.bf16 %v329, %v329
      %v331 = vld [vmem:[%s1] sm:$0xff]
      %v332 = vld [vmem:[%s1 + $0x8] sm:$0xff]
      %v333 = vld [vmem:[%s1 + $0x10] sm:$0xff]
      %v334 = vld [vmem:[%s1 + $0x18] sm:$0xff]
      %v335 = vld [vmem:[%s1 + $0x20] sm:$0xff]
      %v336 = vld [vmem:[%s1 + $0x28] sm:$0xff]
      %v337 = vld [vmem:[%s1 + $0x30] sm:$0xff]
      %v338 = vld [vmem:[%s1 + $0x38] sm:$0xff]
      %v339 = vld [vmem:[%s2] sm:$0xf]
      %v341 = vlaneseq
      %v342 = vshrl.u32 %v341, 7
      %v343 = vsub.s32 0, %v342
      %v344 = vrot.slane %v339, %v343
      %v345 = vlaneseq
      %v346 = vshrl.u32 %v345, 7
      %v347 = vsub.s32 1, %v346
      %v348 = vrot.slane %v339, %v347
      %v349 = vlaneseq
      %v350 = vshrl.u32 %v349, 7
      %v351 = vsub.s32 2, %v350
      %v352 = vrot.slane %v339, %v351
      %v353 = vlaneseq
      %v354 = vshrl.u32 %v353, 7
      %v355 = vsub.s32 3, %v354
      %v356 = vrot.slane %v339, %v355
      %v369 = vunpack.c.l.b16 %v331
      %v370 = vunpack.c.h.b16 %v331
      %v371 = vunpack.c.l.b16 %v332
      %v372 = vunpack.c.h.b16 %v332
      %v373 = vunpack.c.l.b16 %v333
      %v374 = vunpack.c.h.b16 %v333
      %v375 = vunpack.c.l.b16 %v334
      %v376 = vunpack.c.h.b16 %v334
      %v377 = vunpack.c.l.b16 %v335
      %v378 = vunpack.c.h.b16 %v335
      %v379 = vunpack.c.l.b16 %v336
      %v380 = vunpack.c.h.b16 %v336
      %v381 = vunpack.c.l.b16 %v337
      %v382 = vunpack.c.h.b16 %v337
      %v383 = vunpack.c.l.b16 %v338
      %v384 = vunpack.c.h.b16 %v338
      %v385 = vpack.c.b16 %v373, %v369
      %v386 = vpack.c.b16 %v374, %v370
      %v387 = vpack.c.b16 %v375, %v371
      %v388 = vpack.c.b16 %v376, %v372
      %v389 = vpack.c.b16 %v381, %v377
      %v390 = vpack.c.b16 %v382, %v378
      %v391 = vpack.c.b16 %v383, %v379
      %v392 = vpack.c.b16 %v384, %v380
      %vm401 = vcmask 261120
      %v403 = vsel %vm401, %v330, 0
      %405 = vmatprep.subr.bf16.mxu0 %v386
      %406 = vmatpush1.bf16.msra.mxu0 %v385
      %407 = vmatprep.subr.bf16.mxu0 %v390
      %408 = vmatpush1.bf16.msra.mxu0 %v389
      %409 = vmatprep.subr.bf16.mxu0 0
      %410 = vmatpush1.bf16.msra.mxu0 0
      %411 = vmatprep.subr.bf16.mxu0 0
      %412 = vmatpush1.bf16.msra.mxu0 0
      %413 = vmatprep.subr.bf16.mxu0 0
      %414 = vmatpush1.bf16.msra.mxu0 0
      %415 = vmatprep.subr.bf16.mxu0 0
      %416 = vmatpush1.bf16.msra.mxu0 0
      %417 = vmatprep.subr.bf16.mxu0 0
      %418 = vmatpush1.bf16.msra.mxu0 0
      %419 = vmatprep.subr.bf16.mxu0 0
      %420 = vmatpush1.bf16.msra.mxu0 0
      %421 = vmatprep.subr.bf16.mxu0 0
      %422 = vmatpush1.bf16.msra.mxu0 0
      %423 = vmatprep.subr.bf16.mxu0 0
      %424 = vmatpush1.bf16.msra.mxu0 0
      %425 = vmatprep.subr.bf16.mxu0 0
      %426 = vmatpush1.bf16.msra.mxu0 0
      %427 = vmatprep.subr.bf16.mxu0 0
      %428 = vmatpush1.bf16.msra.mxu0 0
      %429 = vmatprep.subr.bf16.mxu0 0
      %430 = vmatpush1.bf16.msra.mxu0 0
      %431 = vmatprep.subr.bf16.mxu0 0
      %432 = vmatpush1.bf16.msra.mxu0 0
      %433 = vmatprep.subr.bf16.mxu0 0
      %434 = vmatpush1.bf16.msra.mxu0 0
      %435 = vmatprep.subr.bf16.mxu0 0
      %436 = vmatpush1.bf16.msra.mxu0 0
      %437 = vmatprep.mubr.bf16.mxu0 0
      %438 = vmatmul.mubr.bf16.gmra.mrb[0].mxu0 %v403
      %v439 = vpop.f32.mrb[0].mxu0
      %v440 = vadd.f32 %v344, %v439
      %v441 = vpop.f32.mrb[0].mxu0
      %v442 = vadd.f32 %v348, %v441
      %v443 = vpop.f32.mrb[0].mxu0
      %v444 = vpop.f32.mrb[0].mxu0
      %445 = vdwg.mxu0
      %446 = vmatprep.subr.bf16.mxu0 %v388
      %447 = vmatpush1.bf16.msra.mxu0 %v387
      %448 = vmatprep.subr.bf16.mxu0 %v392
      %449 = vmatpush1.bf16.msra.mxu0 %v391
      %450 = vmatprep.subr.bf16.mxu0 0
      %451 = vmatpush1.bf16.msra.mxu0 0
      %452 = vmatprep.subr.bf16.mxu0 0
      %453 = vmatpush1.bf16.msra.mxu0 0
      %454 = vmatprep.subr.bf16.mxu0 0
      %455 = vmatpush1.bf16.msra.mxu0 0
      %456 = vmatprep.subr.bf16.mxu0 0
      %457 = vmatpush1.bf16.msra.mxu0 0
      %458 = vmatprep.subr.bf16.mxu0 0
      %459 = vmatpush1.bf16.msra.mxu0 0
      %460 = vmatprep.subr.bf16.mxu0 0
      %461 = vmatpush1.bf16.msra.mxu0 0
      %462 = vmatprep.subr.bf16.mxu0 0
      %463 = vmatpush1.bf16.msra.mxu0 0
      %464 = vmatprep.subr.bf16.mxu0 0
      %465 = vmatpush1.bf16.msra.mxu0 0
      %466 = vmatprep.subr.bf16.mxu0 0
      %467 = vmatpush1.bf16.msra.mxu0 0
      %468 = vmatprep.subr.bf16.mxu0 0
      %469 = vmatpush1.bf16.msra.mxu0 0
      %470 = vmatprep.subr.bf16.mxu0 0
      %471 = vmatpush1.bf16.msra.mxu0 0
      %472 = vmatprep.subr.bf16.mxu0 0
      %473 = vmatpush1.bf16.msra.mxu0 0
      %474 = vmatprep.subr.bf16.mxu0 0
      %475 = vmatpush1.bf16.msra.mxu0 0
      %476 = vmatprep.subr.bf16.mxu0 0
      %477 = vmatpush1.bf16.msra.mxu0 0
      %478 = vmatprep.mubr.bf16.mxu0 0
      %479 = vmatmul.mubr.bf16.gmra.mrb[0].mxu0 %v403
      %v480 = vpop.f32.mrb[0].mxu0
      %v481 = vadd.f32 %v352, %v480
      %v482 = vpop.f32.mrb[0].mxu0
      %v483 = vadd.f32 %v356, %v482
      %v484 = vpop.f32.mrb[0].mxu0
      %v485 = vpop.f32.mrb[0].mxu0
      %486 = vdwg.mxu0
      %v487 = vmax.f32 %v440, 0.0
      %v488 = vmax.f32 %v442, 0.0
      %v489 = vmax.f32 %v481, 0.0
      %v490 = vmax.f32 %v483, 0.0
      %v491 = vpack.c.bf16 %v487, %v487
      %v492 = vpack.c.bf16 %v488, %v488
      %v493 = vpack.c.bf16 %v489, %v489
      %v494 = vpack.c.bf16 %v490, %v490
      %v495 = vld [vmem:[%s3] sm:$0xf]
      %v496 = vld [vmem:[%s3 + $0x4] sm:$0xf]
      %v497 = vld [vmem:[%s3 + $0x8] sm:$0xf]
      %v498 = vld [vmem:[%s3 + $0xc] sm:$0xf]
      %v499 = vld [vmem:[%s3 + $0x10] sm:$0xf]
      %v500 = vld [vmem:[%s3 + $0x14] sm:$0xf]
      %v501 = vld [vmem:[%s3 + $0x18] sm:$0xf]
      %v502 = vld [vmem:[%s3 + $0x1c] sm:$0xf]
      %v503 = vld [vmem:[%s3 + $0x20] sm:$0xf]
      %v504 = vld [vmem:[%s3 + $0x24] sm:$0xf]
      %v505 = vld [vmem:[%s3 + $0x28] sm:$0xf]
      %v506 = vld [vmem:[%s3 + $0x2c] sm:$0xf]
      %v507 = vld [vmem:[%s3 + $0x30] sm:$0xf]
      %v508 = vld [vmem:[%s3 + $0x34] sm:$0xf]
      %v509 = vld [vmem:[%s3 + $0x38] sm:$0xf]
      %v510 = vld [vmem:[%s3 + $0x3c] sm:$0xf]
      %v511 = vld [vmem:[%s3 + $0x40] sm:$0xf]
      %v512 = vld [vmem:[%s3 + $0x44] sm:$0xf]
      %v513 = vld [vmem:[%s3 + $0x48] sm:$0xf]
      %v514 = vld [vmem:[%s3 + $0x4c] sm:$0xf]
      %v515 = vld [vmem:[%s3 + $0x50] sm:$0xf]
      %v516 = vld [vmem:[%s3 + $0x54] sm:$0xf]
      %v517 = vld [vmem:[%s3 + $0x58] sm:$0xf]
      %v518 = vld [vmem:[%s3 + $0x5c] sm:$0xf]
      %v519 = vld [vmem:[%s3 + $0x60] sm:$0xf]
      %v520 = vld [vmem:[%s3 + $0x64] sm:$0xf]
      %v521 = vld [vmem:[%s3 + $0x68] sm:$0xf]
      %v522 = vld [vmem:[%s3 + $0x6c] sm:$0xf]
      %v523 = vld [vmem:[%s3 + $0x70] sm:$0xf]
      %v524 = vld [vmem:[%s3 + $0x74] sm:$0xf]
      %v525 = vld [vmem:[%s3 + $0x78] sm:$0xf]
      %v526 = vld [vmem:[%s3 + $0x7c] sm:$0xf]
      %v527 = vld [vmem:[%s3 + $0x80] sm:$0xf]
      %v528 = vld [vmem:[%s3 + $0x84] sm:$0xf]
      %v529 = vld [vmem:[%s3 + $0x88] sm:$0xf]
      %v530 = vld [vmem:[%s3 + $0x8c] sm:$0xf]
      %v531 = vld [vmem:[%s3 + $0x90] sm:$0xf]
      %v532 = vld [vmem:[%s3 + $0x94] sm:$0xf]
      %v533 = vld [vmem:[%s3 + $0x98] sm:$0xf]
      %v534 = vld [vmem:[%s3 + $0x9c] sm:$0xf]
      %v535 = vld [vmem:[%s3 + $0xa0] sm:$0xf]
      %v536 = vld [vmem:[%s3 + $0xa4] sm:$0xf]
      %v537 = vld [vmem:[%s3 + $0xa8] sm:$0xf]
      %v538 = vld [vmem:[%s3 + $0xac] sm:$0xf]
      %v539 = vld [vmem:[%s3 + $0xb0] sm:$0xf]
      %v540 = vld [vmem:[%s3 + $0xb4] sm:$0xf]
      %v541 = vld [vmem:[%s3 + $0xb8] sm:$0xf]
      %v542 = vld [vmem:[%s3 + $0xbc] sm:$0xf]
      %v543 = vld [vmem:[%s3 + $0xc0] sm:$0xf]
      %v544 = vld [vmem:[%s3 + $0xc4] sm:$0xf]
      %v545 = vld [vmem:[%s3 + $0xc8] sm:$0xf]
      %v546 = vld [vmem:[%s3 + $0xcc] sm:$0xf]
      %v547 = vld [vmem:[%s3 + $0xd0] sm:$0xf]
      %v548 = vld [vmem:[%s3 + $0xd4] sm:$0xf]
      %v549 = vld [vmem:[%s3 + $0xd8] sm:$0xf]
      %v550 = vld [vmem:[%s3 + $0xdc] sm:$0xf]
      %v551 = vld [vmem:[%s3 + $0xe0] sm:$0xf]
      %v552 = vld [vmem:[%s3 + $0xe4] sm:$0xf]
      %v553 = vld [vmem:[%s3 + $0xe8] sm:$0xf]
      %v554 = vld [vmem:[%s3 + $0xec] sm:$0xf]
      %v555 = vld [vmem:[%s3 + $0xf0] sm:$0xf]
      %v556 = vld [vmem:[%s3 + $0xf4] sm:$0xf]
      %v557 = vld [vmem:[%s3 + $0xf8] sm:$0xf]
      %v558 = vld [vmem:[%s3 + $0xfc] sm:$0xf]
      %v559 = vld [vmem:[%s4] sm:$0x1]
      %v561 = vlaneseq
      %v562 = vshrl.u32 %v561, 7
      %v563 = vsub.s32 0, %v562
      %v564 = vrot.slane %v559, %v563
      %v630 = vunpack.c.l.b16 %v495
      %v631 = vunpack.c.l.b16 %v496
      %v632 = vunpack.c.l.b16 %v497
      %v633 = vunpack.c.l.b16 %v498
      %v634 = vunpack.c.l.b16 %v499
      %v635 = vunpack.c.l.b16 %v500
      %v636 = vunpack.c.l.b16 %v501
      %v637 = vunpack.c.l.b16 %v502
      %v638 = vunpack.c.l.b16 %v503
      %v639 = vunpack.c.l.b16 %v504
      %v640 = vunpack.c.l.b16 %v505
      %v641 = vunpack.c.l.b16 %v506
      %v642 = vunpack.c.l.b16 %v507
      %v643 = vunpack.c.l.b16 %v508
      %v644 = vunpack.c.l.b16 %v509
      %v645 = vunpack.c.l.b16 %v510
      %v646 = vunpack.c.l.b16 %v511
      %v647 = vunpack.c.l.b16 %v512
      %v648 = vunpack.c.l.b16 %v513
      %v649 = vunpack.c.l.b16 %v514
      %v650 = vunpack.c.l.b16 %v515
      %v651 = vunpack.c.l.b16 %v516
      %v652 = vunpack.c.l.b16 %v517
      %v653 = vunpack.c.l.b16 %v518
      %v654 = vunpack.c.l.b16 %v519
      %v655 = vunpack.c.l.b16 %v520
      %v656 = vunpack.c.l.b16 %v521
      %v657 = vunpack.c.l.b16 %v522
      %v658 = vunpack.c.l.b16 %v523
      %v659 = vunpack.c.l.b16 %v524
      %v660 = vunpack.c.l.b16 %v525
      %v661 = vunpack.c.l.b16 %v526
      %v662 = vunpack.c.l.b16 %v527
      %v663 = vunpack.c.l.b16 %v528
      %v664 = vunpack.c.l.b16 %v529
      %v665 = vunpack.c.l.b16 %v530
      %v666 = vunpack.c.l.b16 %v531
      %v667 = vunpack.c.l.b16 %v532
      %v668 = vunpack.c.l.b16 %v533
      %v669 = vunpack.c.l.b16 %v534
      %v670 = vunpack.c.l.b16 %v535
      %v671 = vunpack.c.l.b16 %v536
      %v672 = vunpack.c.l.b16 %v537
      %v673 = vunpack.c.l.b16 %v538
      %v674 = vunpack.c.l.b16 %v539
      %v675 = vunpack.c.l.b16 %v540
      %v676 = vunpack.c.l.b16 %v541
      %v677 = vunpack.c.l.b16 %v542
      %v678 = vunpack.c.l.b16 %v543
      %v679 = vunpack.c.l.b16 %v544
      %v680 = vunpack.c.l.b16 %v545
      %v681 = vunpack.c.l.b16 %v546
      %v682 = vunpack.c.l.b16 %v547
      %v683 = vunpack.c.l.b16 %v548
      %v684 = vunpack.c.l.b16 %v549
      %v685 = vunpack.c.l.b16 %v550
      %v686 = vunpack.c.l.b16 %v551
      %v687 = vunpack.c.l.b16 %v552
      %v688 = vunpack.c.l.b16 %v553
      %v689 = vunpack.c.l.b16 %v554
      %v690 = vunpack.c.l.b16 %v555
      %v691 = vunpack.c.l.b16 %v556
      %v692 = vunpack.c.l.b16 %v557
      %v693 = vunpack.c.l.b16 %v558
      %v694 = vpack.c.b16 %v631, %v630
      %v695 = vpack.c.b16 %v633, %v632
      %v696 = vpack.c.b16 %v635, %v634
      %v697 = vpack.c.b16 %v637, %v636
      %v698 = vpack.c.b16 %v639, %v638
      %v699 = vpack.c.b16 %v641, %v640
      %v700 = vpack.c.b16 %v643, %v642
      %v701 = vpack.c.b16 %v645, %v644
      %v702 = vpack.c.b16 %v647, %v646
      %v703 = vpack.c.b16 %v649, %v648
      %v704 = vpack.c.b16 %v651, %v650
      %v705 = vpack.c.b16 %v653, %v652
      %v706 = vpack.c.b16 %v655, %v654
      %v707 = vpack.c.b16 %v657, %v656
      %v708 = vpack.c.b16 %v659, %v658
      %v709 = vpack.c.b16 %v661, %v660
      %v710 = vpack.c.b16 %v663, %v662
      %v711 = vpack.c.b16 %v665, %v664
      %v712 = vpack.c.b16 %v667, %v666
      %v713 = vpack.c.b16 %v669, %v668
      %v714 = vpack.c.b16 %v671, %v670
      %v715 = vpack.c.b16 %v673, %v672
      %v716 = vpack.c.b16 %v675, %v674
      %v717 = vpack.c.b16 %v677, %v676
      %v718 = vpack.c.b16 %v679, %v678
      %v719 = vpack.c.b16 %v681, %v680
      %v720 = vpack.c.b16 %v683, %v682
      %v721 = vpack.c.b16 %v685, %v684
      %v722 = vpack.c.b16 %v687, %v686
      %v723 = vpack.c.b16 %v689, %v688
      %v724 = vpack.c.b16 %v691, %v690
      %v725 = vpack.c.b16 %v693, %v692
      %758 = vmatprep.subr.bf16.mxu0 0
      %759 = vmatpush1.bf16.msra.mxu0 %v694
      %760 = vmatprep.subr.bf16.mxu0 0
      %761 = vmatpush1.bf16.msra.mxu0 %v695
      %762 = vmatprep.subr.bf16.mxu0 0
      %763 = vmatpush1.bf16.msra.mxu0 %v696
      %764 = vmatprep.subr.bf16.mxu0 0
      %765 = vmatpush1.bf16.msra.mxu0 %v697
      %766 = vmatprep.subr.bf16.mxu0 0
      %767 = vmatpush1.bf16.msra.mxu0 %v698
      %768 = vmatprep.subr.bf16.mxu0 0
      %769 = vmatpush1.bf16.msra.mxu0 %v699
      %770 = vmatprep.subr.bf16.mxu0 0
      %771 = vmatpush1.bf16.msra.mxu0 %v700
      %772 = vmatprep.subr.bf16.mxu0 0
      %773 = vmatpush1.bf16.msra.mxu0 %v701
      %774 = vmatprep.subr.bf16.mxu0 0
      %775 = vmatpush1.bf16.msra.mxu0 %v702
      %776 = vmatprep.subr.bf16.mxu0 0
      %777 = vmatpush1.bf16.msra.mxu0 %v703
      %778 = vmatprep.subr.bf16.mxu0 0
      %779 = vmatpush1.bf16.msra.mxu0 %v704
      %780 = vmatprep.subr.bf16.mxu0 0
      %781 = vmatpush1.bf16.msra.mxu0 %v705
      %782 = vmatprep.subr.bf16.mxu0 0
      %783 = vmatpush1.bf16.msra.mxu0 %v706
      %784 = vmatprep.subr.bf16.mxu0 0
      %785 = vmatpush1.bf16.msra.mxu0 %v707
      %786 = vmatprep.subr.bf16.mxu0 0
      %787 = vmatpush1.bf16.msra.mxu0 %v708
      %788 = vmatprep.subr.bf16.mxu0 0
      %789 = vmatpush1.bf16.msra.mxu0 %v709
      %790 = vmatprep.mubr.bf16.mxu0 %v492
      %791 = vmatmul.mubr.bf16.gmra.mrb[0].mxu0 %v491
      %v792 = vpop.f32.mrb[0].mxu0
      %v793 = vadd.f32 %v564, %v792
      %v794 = vpop.f32.mrb[0].mxu0
      %v795 = vpop.f32.mrb[0].mxu0
      %v796 = vpop.f32.mrb[0].mxu0
      %797 = vdwg.mxu0
      %798 = vmatprep.subr.bf16.mxu0 0
      %799 = vmatpush1.bf16.msra.mxu0 %v710
      %800 = vmatprep.subr.bf16.mxu0 0
      %801 = vmatpush1.bf16.msra.mxu0 %v711
      %802 = vmatprep.subr.bf16.mxu0 0
      %803 = vmatpush1.bf16.msra.mxu0 %v712
      %804 = vmatprep.subr.bf16.mxu0 0
      %805 = vmatpush1.bf16.msra.mxu0 %v713
      %806 = vmatprep.subr.bf16.mxu0 0
      %807 = vmatpush1.bf16.msra.mxu0 %v714
      %808 = vmatprep.subr.bf16.mxu0 0
      %809 = vmatpush1.bf16.msra.mxu0 %v715
      %810 = vmatprep.subr.bf16.mxu0 0
      %811 = vmatpush1.bf16.msra.mxu0 %v716
      %812 = vmatprep.subr.bf16.mxu0 0
      %813 = vmatpush1.bf16.msra.mxu0 %v717
      %814 = vmatprep.subr.bf16.mxu0 0
      %815 = vmatpush1.bf16.msra.mxu0 %v718
      %816 = vmatprep.subr.bf16.mxu0 0
      %817 = vmatpush1.bf16.msra.mxu0 %v719
      %818 = vmatprep.subr.bf16.mxu0 0
      %819 = vmatpush1.bf16.msra.mxu0 %v720
      %820 = vmatprep.subr.bf16.mxu0 0
      %821 = vmatpush1.bf16.msra.mxu0 %v721
      %822 = vmatprep.subr.bf16.mxu0 0
      %823 = vmatpush1.bf16.msra.mxu0 %v722
      %824 = vmatprep.subr.bf16.mxu0 0
      %825 = vmatpush1.bf16.msra.mxu0 %v723
      %826 = vmatprep.subr.bf16.mxu0 0
      %827 = vmatpush1.bf16.msra.mxu0 %v724
      %828 = vmatprep.subr.bf16.mxu0 0
      %829 = vmatpush1.bf16.msra.mxu0 %v725
      %830 = vmatprep.mubr.bf16.mxu0 %v494
      %831 = vmatmul.mubr.bf16.gmra.mrb[0].mxu0 %v493
      %v832 = vpop.f32.mrb[0].mxu0
      %v833 = vadd.f32 %v793, %v832
      %v834 = vpop.f32.mrb[0].mxu0
      %v835 = vpop.f32.mrb[0].mxu0
      %v836 = vpop.f32.mrb[0].mxu0
      %837 = vdwg.mxu0
      %v838 = vmax.f32 %v833, 0.0
      %v839 = vpack.c.bf16 %v838, %v838
      %v840 = vld [vmem:[%s5] sm:$0xf]
      %v841 = vld [vmem:[%s5 + $0x4] sm:$0xf]
      %v842 = vld [vmem:[%s5 + $0x8] sm:$0xf]
      %v843 = vld [vmem:[%s5 + $0xc] sm:$0xf]
      %v844 = vld [vmem:[%s5 + $0x10] sm:$0xf]
      %v845 = vld [vmem:[%s5 + $0x14] sm:$0xf]
      %v846 = vld [vmem:[%s5 + $0x18] sm:$0xf]
      %v847 = vld [vmem:[%s5 + $0x1c] sm:$0xf]
      %v848 = vld [vmem:[%s5 + $0x20] sm:$0xf]
      %v849 = vld [vmem:[%s5 + $0x24] sm:$0xf]
      %v850 = vld [vmem:[%s5 + $0x28] sm:$0xf]
      %v851 = vld [vmem:[%s5 + $0x2c] sm:$0xf]
      %v852 = vld [vmem:[%s5 + $0x30] sm:$0xf]
      %v853 = vld [vmem:[%s5 + $0x34] sm:$0xf]
      %v854 = vld [vmem:[%s5 + $0x38] sm:$0xf]
      %v855 = vld [vmem:[%s5 + $0x3c] sm:$0xf]
      %v856 = vld [vmem:[%s6] sm:$0x1]
      %v858 = vlaneseq
      %v859 = vshrl.u32 %v858, 7
      %v860 = vsub.s32 0, %v859
      %v861 = vrot.slane %v856, %v860
      %v879 = vunpack.c.l.b16 %v840
      %v880 = vunpack.c.l.b16 %v841
      %v881 = vunpack.c.l.b16 %v842
      %v882 = vunpack.c.l.b16 %v843
      %v883 = vunpack.c.l.b16 %v844
      %v884 = vunpack.c.l.b16 %v845
      %v885 = vunpack.c.l.b16 %v846
      %v886 = vunpack.c.l.b16 %v847
      %v887 = vunpack.c.l.b16 %v848
      %v888 = vunpack.c.l.b16 %v849
      %v889 = vunpack.c.l.b16 %v850
      %v890 = vunpack.c.l.b16 %v851
      %v891 = vunpack.c.l.b16 %v852
      %v892 = vunpack.c.l.b16 %v853
      %v893 = vunpack.c.l.b16 %v854
      %v894 = vunpack.c.l.b16 %v855
      %v895 = vpack.c.b16 %v880, %v879
      %v896 = vpack.c.b16 %v882, %v881
      %v897 = vpack.c.b16 %v884, %v883
      %v898 = vpack.c.b16 %v886, %v885
      %v899 = vpack.c.b16 %v888, %v887
      %v900 = vpack.c.b16 %v890, %v889
      %v901 = vpack.c.b16 %v892, %v891
      %v902 = vpack.c.b16 %v894, %v893
      %911 = vmatprep.subr.bf16.mxu0 0
      %912 = vmatpush1.bf16.msra.mxu0 %v895
      %913 = vmatprep.subr.bf16.mxu0 0
      %914 = vmatpush1.bf16.msra.mxu0 %v896
      %915 = vmatprep.subr.bf16.mxu0 0
      %916 = vmatpush1.bf16.msra.mxu0 %v897
      %917 = vmatprep.subr.bf16.mxu0 0
      %918 = vmatpush1.bf16.msra.mxu0 %v898
      %919 = vmatprep.subr.bf16.mxu0 0
      %920 = vmatpush1.bf16.msra.mxu0 %v899
      %921 = vmatprep.subr.bf16.mxu0 0
      %922 = vmatpush1.bf16.msra.mxu0 %v900
      %923 = vmatprep.subr.bf16.mxu0 0
      %924 = vmatpush1.bf16.msra.mxu0 %v901
      %925 = vmatprep.subr.bf16.mxu0 0
      %926 = vmatpush1.bf16.msra.mxu0 %v902
      %927 = vmatprep.subr.bf16.mxu0 0
      %928 = vmatpush1.bf16.msra.mxu0 0
      %929 = vmatprep.subr.bf16.mxu0 0
      %930 = vmatpush1.bf16.msra.mxu0 0
      %931 = vmatprep.subr.bf16.mxu0 0
      %932 = vmatpush1.bf16.msra.mxu0 0
      %933 = vmatprep.subr.bf16.mxu0 0
      %934 = vmatpush1.bf16.msra.mxu0 0
      %935 = vmatprep.subr.bf16.mxu0 0
      %936 = vmatpush1.bf16.msra.mxu0 0
      %937 = vmatprep.subr.bf16.mxu0 0
      %938 = vmatpush1.bf16.msra.mxu0 0
      %939 = vmatprep.subr.bf16.mxu0 0
      %940 = vmatpush1.bf16.msra.mxu0 0
      %941 = vmatprep.subr.bf16.mxu0 0
      %942 = vmatpush1.bf16.msra.mxu0 0
      %943 = vmatprep.mubr.bf16.mxu0 0
      %944 = vmatmul.mubr.bf16.gmra.mrb[0].mxu0 %v839
      %v945 = vpop.f32.mrb[0].mxu0
      %v946 = vadd.f32 %v861, %v945
      %v947 = vpop.f32.mrb[0].mxu0
      %v948 = vpop.f32.mrb[0].mxu0
      %v949 = vpop.f32.mrb[0].mxu0
      %950 = vdwg.mxu0
      %v951 = vmax.f32 %v946, 0.0
      %952 = vxpose.xlu0.b32.start [1/16] %v951, 128
      %953 = vxpose.xlu0.b32.cont [2/16] 0.0, 128
      %954 = vxpose.xlu0.b32.cont [3/16] 0.0, 128
      %955 = vxpose.xlu0.b32.cont [4/16] 0.0, 128
      %956 = vxpose.xlu0.b32.cont [5/16] 0.0, 128
      %957 = vxpose.xlu0.b32.cont [6/16] 0.0, 128
      %958 = vxpose.xlu0.b32.cont [7/16] 0.0, 128
      %959 = vxpose.xlu0.b32.cont [8/16] 0.0, 128
      %960 = vxpose.xlu0.b32.cont [9/16] 0.0, 128
      %961 = vxpose.xlu0.b32.cont [10/16] 0.0, 128
      %962 = vxpose.xlu0.b32.cont [11/16] 0.0, 128
      %963 = vxpose.xlu0.b32.cont [12/16] 0.0, 128
      %964 = vxpose.xlu0.b32.cont [13/16] 0.0, 128
      %965 = vxpose.xlu0.b32.cont [14/16] 0.0, 128
      %966 = vxpose.xlu0.b32.cont [15/16] 0.0, 128
      %967 = vxpose.xlu0.b32.end [16/16] 0.0, 128
      %v968 = vpop.trf.xlu0
      %v969 = vpop.trf.xlu0
      %v970 = vpop.trf.xlu0
      %v971 = vpop.trf.xlu0
      %v972 = vpop.trf.xlu0
      %v973 = vpop.trf.xlu0
      %v974 = vpop.trf.xlu0
      %v975 = vpop.trf.xlu0
      %v976 = vpop.trf.xlu0
      %v977 = vpop.trf.xlu0
      %v978 = vpop.trf.xlu0
      %v979 = vpop.trf.xlu0
      %v980 = vpop.trf.xlu0
      %v981 = vpop.trf.xlu0
      %v982 = vpop.trf.xlu0
      %v983 = vpop.trf.xlu0
      %v984 = vld [vmem:[%s7] sm:$0xff]
      %v985 = vld [vmem:[%s7 + $0x8] sm:$0xff]
      %v986 = vld [vmem:[%s7 + $0x10] sm:$0xff]
      %v987 = vld [vmem:[%s7 + $0x18] sm:$0xff]
      %989 = vset.pattern.permute.xlu0 0
      %990 = vperm.xlu0 %989, %v984
      %v991 = vpop.permute.xlu0 %990
      %994 = vset.pattern.permute.xlu0 0
      %995 = vperm.xlu0 %994, %v985
      %v996 = vpop.permute.xlu0 %995
      %999 = vset.pattern.permute.xlu0 0
      %1000 = vperm.xlu0 %999, %v986
      %v1001 = vpop.permute.xlu0 %1000
      %1004 = vset.pattern.permute.xlu0 0
      %1005 = vperm.xlu0 %1004, %v987
      %v1006 = vpop.permute.xlu0 %1005
      %v1008 = vmul.f32 %v968, %v991
      %v1009 = vmul.f32 %v969, %v996
      %v1010 = vmul.f32 %v970, %v1001
      %v1011 = vmul.f32 %v971, %v1006
      %vm1012 = vcmask 64512
      %v1013 = vsel %vm1012, %v1008, 0.0
      %v1014 = vsel %vm1012, %v1009, 0.0
      %v1015 = vadd.f32 %v1013, %v1014
      %v1016 = vsel %vm1012, %v1010, 0.0
      %v1017 = vadd.f32 %v1015, %v1016
      %v1018 = vsel %vm1012, %v1011, 0.0
      %v1019 = vadd.f32 %v1017, %v1018
      %v1020 = vrot.slane %v1019, 4
      %v1021 = vadd.f32 %v1019, %v1020
      %v1022 = vrot.slane %v1021, 2
      %v1023 = vadd.f32 %v1021, %v1022
      %v1024 = vrot.slane %v1023, 1
      %v1025 = vadd.f32 %v1023, %v1024
      %v1026 = vld [vmem:[#allocation2] sm:$0x1]
      %1028 = vset.pattern.permute.xlu0 0
      %1029 = vperm.xlu0 %1028, %v1026
      %v1030 = vpop.permute.xlu0 %1029
      %v1032 = vlaneseq
      %v1033 = vshrl.u32 %v1032, 7
      %v1034 = vsub.s32 0, %v1033
      %v1035 = vrot.slane %v1030, %v1034
      %v1036 = vadd.f32 %v1025, %v1035
      %v1037 = vxor.u32 %v1036, 2147483648
      %v1038 = vmul.f32 %v1037, 1.442695
      %v1039 = vpow.pop %v1038
      %v1040 = vadd.f32 %v1039, 1.0
      %v1041 = vrcp.pop %v1040
      %v1042 = vmul.f32 1.0, %v1041
      %vm1043 = vcmask 57344
      %1044 = vst.msk [vmem:[%s327] sm:$0x1] %vm1043, %v1042
      %p1045 = scmp.lt.s32.totalorder %s22, 1
      %s1046 = scalar_select %p1045, %s22, 1
      %s1047 = scalar_lea.vmem %s9, %s1046
      // Predicated region
      $region57: #{improved_nn_forward.1} parent=55 // pred_check
        %p1048 = pneg %p234
      $region58: #{improved_nn_forward.1} parent=55 // pred_check_branch
        %1050 = sbr.rel (%p1048) target = $region60
      $region59: #{improved_nn_forward.1} parent=55 // pred_region
        _
      $region60: #{improved_nn_forward.1} parent=55 // pred_fallthru
        _
    $region56: #{improved_nn_forward.1} parent=5 // pred_fallthru
      _
    %p1051 = scmp.le.s32.totalorder 2, %s17
    // Predicated region
    $region61: #{improved_nn_forward.1} parent=5 // pred_check
      %p1052 = pneg %p1051
    $region62: #{improved_nn_forward.1} parent=5 // pred_check_branch
      %1054 = sbr.rel (%p1052) target = $region64
    $region63: #{improved_nn_forward.1} parent=5 // pred_region
      %s1055 = ssub.s32 %s17, 2
      // Predicated region
      $region65: #{improved_nn_forward.1} parent=63 // pred_check
        %p1056 = pneg %p240
      $region66: #{improved_nn_forward.1} parent=63 // pred_check_branch
        %1058 = sbr.rel (%p1056) target = $region68
      $region67: #{improved_nn_forward.1} parent=63 // pred_region
        %p1059 = scmp.lt.s32.totalorder %s23, 1
        %s1060 = scalar_select %p1059, %s23, 1
        %s1061 = scalar_lea.vmem %s9, %s1060
      $region68: #{improved_nn_forward.1} parent=63 // pred_fallthru
        _
    $region64: #{improved_nn_forward.1} parent=5 // pred_fallthru
      _
  $region6: #{improved_nn_forward.1} parent=0 // loop_footer
    %s21 = sadd.s32 1, %s17
  $region7: #{improved_nn_forward.1} parent=0 // loop_footer_branch
    %16 = sbr.rel target = $region3
  $region8: #{improved_nn_forward.1} parent=0 // loop_exit
    _

</llo_original>
